<compile_context>
chip_gen: v5e
topology: v5e:2x2
jax: 0.10.0
libtpu: 0.0.40
codegen_flags: <defaults>
</compile_context>

<pallas_src>
import jax
import jax.numpy as jnp
import numpy as np
from jax.experimental import pallas as pl
from jax.experimental.pallas import tpu as pltpu


_MIB = 1024 * 1024
# Single-buffer budget for one (int8 input block + output block) pair.
# Double-buffered this is ~16 MiB -- comfortably inside every generation's
# scoped-VMEM default while being far past the ~85%-of-roofline block size.
_BLOCK_BUDGET = 8 * _MIB


def _largest_divisor_multiple(dim: int, unit: int, max_val: int):
    """Largest t <= max_val with t % unit == 0 and dim % t == 0 (None if none)."""
    best = None
    t = unit
    cap = min(dim, max_val)
    while t <= cap:
        if dim % t == 0:
            best = t
        t += unit
    return best


def _supports_bf16_compute() -> bool:
    """True on chips with bf16-native VALUs (v6e/v7x); False on v5e and older."""
    try:
        kind = jax.devices()[0].device_kind.lower()
    except Exception:
        return False
    for old in ("v2", "v3", "v4", "v5"):
        if old in kind:
            return False
    return True


def _pick_tile_o(out_ch: int, max_rows: int) -> int:
    """Row-tile: full dim if it fits, else 32-multiple divisor, else 8-multiple."""
    if out_ch <= max_rows:
        return out_ch
    t = _largest_divisor_multiple(out_ch, 32, max_rows)
    if t is not None:
        return t
    t = _largest_divisor_multiple(out_ch, 8, max_rows)
    if t is not None:
        return t
    return out_ch  # last resort; vmem_limit is derived from the real footprint.


def _choose_tiles(out_ch: int, in_ch: int, out_bytes: int):
    """Pick (tile_o, tile_i) under _BLOCK_BUDGET, preferring contiguous full rows."""
    per_full_row = in_ch * (1 + out_bytes)
    max_rows_full = _BLOCK_BUDGET // max(per_full_row, 1)
    if max_rows_full >= 32 or out_ch <= max_rows_full:
        # Full-row blocks: output DMA is one contiguous HBM region per block.
        tile_i = in_ch
        tile_o = _pick_tile_o(out_ch, max(int(max_rows_full), 1))
    else:
        # 2D tiling for very wide rows: lane-dense multiple-of-128 IN tile.
        tile_i = _largest_divisor_multiple(in_ch, 128, min(in_ch, 4096)) or in_ch
        per_row = tile_i * (1 + out_bytes)
        max_rows = max(_BLOCK_BUDGET // per_row, 1)
        tile_o = _pick_tile_o(out_ch, max_rows)

    # v7x megacore: guarantee >= 2 blocks along the parallel OUT axis.
    if (out_ch // tile_o) * (in_ch // tile_i) < 2:
        if tile_o % 64 == 0:          # halved tile stays a multiple of 32
            tile_o //= 2
        elif tile_o % 16 == 0:        # halved tile stays a multiple of 8
            tile_o //= 2
        # else: weight too tiny / odd-shaped to split cleanly; keep one block.
    return tile_o, tile_i


def construct_tensor_subclass_forward(int_data: jax.Array,
                                      q_scales: jax.Array,
                                      *,
                                      out_dtype=jnp.bfloat16,
                                      tile_o: int | None = None,
                                      tile_i: int | None = None) -> jax.Array:
    """Dequantize an int8 per-channel-quantized weight on TPU via Pallas.

    int_data: [OUT, IN] int8
    q_scales: [OUT]     float (one scale per output channel)
    returns:  [OUT, IN] out_dtype (default bfloat16)
    """
    out_ch, in_ch = int_data.shape
    out_bytes = np.dtype(out_dtype).itemsize
    scales_2d = q_scales.reshape(out_ch, 1).astype(jnp.float32)

    auto_o, auto_i = _choose_tiles(out_ch, in_ch, out_bytes)
    tile_o = auto_o if tile_o is None else tile_o
    tile_i = auto_i if tile_i is None else tile_i
    assert out_ch % tile_o == 0, "OUT must be divisible by tile_o"
    assert in_ch % tile_i == 0, "IN must be divisible by tile_i"
    grid = (out_ch // tile_o, in_ch // tile_i)

    # Right-sized scoped VMEM: double-buffered input+output blocks, the tiny
    # lane-padded scale tile (also double-buffered), plus Mosaic scratch
    # headroom.  Never request a large fraction of the chip for this kernel.
    block_bytes = tile_o * tile_i * (1 + out_bytes)
    scales_bytes = 2 * tile_o * 128 * 4
    vmem_limit = max(2 * block_bytes + scales_bytes + 2 * _MIB, 8 * _MIB)

    use_bf16_compute = (out_dtype == jnp.bfloat16) and _supports_bf16_compute()

    if use_bf16_compute:
        # int8 values are exact in bf16; v6e/v7x VALUs are bf16-native, so this
        # halves per-element VALU work and vreg pressure vs. the f32 path.
        def _dequant_kernel(scale_ref, int_ref, out_ref):
            scale = scale_ref[...].astype(jnp.bfloat16)          # (tile_o, 1)
            out_ref[...] = int_ref[...].astype(jnp.bfloat16) * scale
    else:
        # f32 multiply then cast on store: exact for f32 output, and the right
        # choice on v5e (no bf16 VALU -- bf16 math would be widened anyway).
        def _dequant_kernel(scale_ref, int_ref, out_ref):
            scale = scale_ref[...]                               # (tile_o, 1) f32
            out_ref[...] = (int_ref[...].astype(jnp.float32) * scale).astype(
                out_ref.dtype)

    cost = pl.CostEstimate(
        flops=out_ch * in_ch,                                    # one mul/elem
        transcendentals=0,
        bytes_accessed=out_ch * in_ch * (1 + out_bytes) + out_ch * 4,
    )

    return pl.pallas_call(
        _dequant_kernel,
        out_shape=jax.ShapeDtypeStruct((out_ch, in_ch), out_dtype),
        grid_spec=pltpu.PrefetchScalarGridSpec(
            num_scalar_prefetch=0,
            grid=grid,
            in_specs=[
                # Tiled scales: re-DMA'd only when the o block index changes
                # (IN is the innermost grid axis), a few KiB of VMEM total.
                pl.BlockSpec((tile_o, 1), lambda o, i: (o, 0)),
                pl.BlockSpec((tile_o, tile_i), lambda o, i: (o, i)),
            ],
            out_specs=pl.BlockSpec((tile_o, tile_i), lambda o, i: (o, i)),
        ),
        compiler_params=pltpu.CompilerParams(
            dimension_semantics=("parallel", "parallel"),  # megacore on v7x
            vmem_limit_bytes=int(vmem_limit),
        ),
        cost_estimate=cost,
    )(scales_2d, int_data)


def right_inverse(dequant_weight: jax.Array, q_scales: jax.Array):
    """Flatten back into the subclass fields (glue, no kernel needed)."""
    safe_scales = jnp.where(q_scales == 0, 1.0, q_scales).reshape(-1, 1)
    int_data = jnp.clip(
        jnp.round(dequant_weight.astype(jnp.float32) / safe_scales), -128, 127
    ).astype(jnp.int8)
    return [int_data, q_scales]


if __name__ == "__main__":
    key = jax.random.PRNGKey(0)
    k1, k2 = jax.random.split(key)

    # Small but hardware-native shapes (multiples of the int8 (32, 128) tile).
    OUT, IN = 256, 512
    int_data = jax.random.randint(k1, (OUT, IN), -128, 128, dtype=jnp.int32
                                  ).astype(jnp.int8)
    q_scales = (jax.random.uniform(k2, (OUT,), dtype=jnp.float32) * 0.1
                + 1e-3)

    ref_f32 = int_data.astype(jnp.float32) * q_scales.reshape(-1, 1)

    # float32 output path (f32 math -> exact match to the reference).
    w32 = construct_tensor_subclass_forward(int_data, q_scales,
                                            out_dtype=jnp.float32)
    w32 = jax.block_until_ready(w32)
    assert w32.shape == (OUT, IN) and w32.dtype == jnp.float32
    assert jnp.allclose(w32, ref_f32, atol=1e-6), "f32 mismatch vs reference"

    # Default bfloat16 output (halves the dominant HBM writeback stream).
    wbf = construct_tensor_subclass_forward(int_data, q_scales)
    wbf = jax.block_until_ready(wbf)
    assert wbf.shape == (OUT, IN) and wbf.dtype == jnp.bfloat16
    assert jnp.allclose(wbf.astype(jnp.float32), ref_f32,
                        rtol=1e-2, atol=1e-3), "bf16 mismatch vs reference"

    # right_inverse (field flattening) round-trips the quantized data.
    int_rt, sc_rt = right_inverse(ref_f32, q_scales)
    assert jnp.array_equal(int_rt, int_data)

    print("KERNEL_OK")
</pallas_src>

<mosaic_0001>
module attributes {stable_mosaic.version = 11 : i64} {
  func.func @_dequant_kernel(%arg0: i32, %arg1: i32, %arg2: memref<128x1xf32, #tpu.memory_space<vmem>>, %arg3: memref<128x512xi8, #tpu.memory_space<vmem>>, %arg4: memref<128x512xf32, #tpu.memory_space<vmem>>) attributes {dimension_semantics = [#tpu.dimension_semantics<parallel>, #tpu.dimension_semantics<parallel>], iteration_bounds = array<i64: 2, 1>, scalar_prefetch = 0 : i64, scratch_operands = 0 : i64, tpu.core_type = #tpu.core_type<tc>, window_params = [{transform_indices = @transform_0, window_bounds = array<i64: 128, 1>}, {transform_indices = @transform_1, window_bounds = array<i64: 128, 512>}, {transform_indices = @transform_2, window_bounds = array<i64: 128, 512>}]} {
    %c0 = arith.constant 0 : index
    %c0_0 = arith.constant 0 : index
    %0 = vector.load %arg2[%c0, %c0_0] : memref<128x1xf32, #tpu.memory_space<vmem>>, vector<128x1xf32>
    %c0_1 = arith.constant 0 : index
    %c0_2 = arith.constant 0 : index
    %1 = vector.load %arg3[%c0_1, %c0_2] : memref<128x512xi8, #tpu.memory_space<vmem>>, vector<128x512xi8>
    %2 = arith.sitofp %1 : vector<128x512xi8> to vector<128x512xf32>
    %3 = vector.broadcast %0 : vector<128x1xf32> to vector<128x512xf32>
    %4 = arith.mulf %2, %3 : vector<128x512xf32>
    %c0_3 = arith.constant 0 : index
    %c0_4 = arith.constant 0 : index
    %5 = vector.load %arg4[%c0_3, %c0_4] : memref<128x512xf32, #tpu.memory_space<vmem>>, vector<128x512xf32>
    tpu.vector_store %arg4[%c0_3, %c0_4], %4 {strides = array<i32>} : memref<128x512xf32, #tpu.memory_space<vmem>>, vector<128x512xf32>,
    return
  }
  func.func @transform_0(%arg0: i32, %arg1: i32) -> (i32, i32) {
    %c0_i32 = arith.constant 0 : i32
    %c0_i32_0 = arith.constant 0 : i32
    return %arg0, %c0_i32 : i32, i32
  }
  func.func @transform_1(%arg0: i32, %arg1: i32) -> (i32, i32) {
    %c0_i32 = arith.constant 0 : i32
    return %arg0, %arg1 : i32, i32
  }
  func.func @transform_2(%arg0: i32, %arg1: i32) -> (i32, i32) {
    %c0_i32 = arith.constant 0 : i32
    return %arg0, %arg1 : i32, i32
  }
}

</mosaic_0001>

<llo_original>
// kernel: tpu_custom_call.1
$region0: #{tpu_custom_call.1}
  #allocation0 [shape = 'u32[]', space=smem, size = 0x4, offset = 0x4, fixed_abs, tag = 'smem constant byte address 0x4 - core index']
  #allocation1 [shape = 'u32[72,128]{1,0:T(1,128)}', space=vmem, size = 0x9000, scoped, tag = 'internal scratch']
  %s0 = inlined_call_operand.vmem [shape: f32[256,1], index: 0, kind: input, shape index: {}]
  %s1 = inlined_call_operand.vmem [shape: s8[256,512], index: 1, kind: input, shape index: {}]
  %s2 = inlined_call_operand.hbm [shape: f32[256,512], index: 2, kind: output, shape index: {}]
  %s3 = sld [smem:[#allocation0]]
  $region41: #{tpu_custom_call.1} parent=0
    _
  %s5 = ssub.s32 1, %s3
  %s6 = scalar_select 0, %s5, %s3
  $region1: #{tpu_custom_call.1} parent=0
    #allocation2 [shape = 'u8[524288]{0}', space=vmem, size = 0x80000, scoped, tag = 'output window, operand 0']
    #allocation3 [shape = 's32[2]{0}', space=sflag, size = 0x8, scoped, tag = 'scoped memory for tpu_custom_call.1']
    %7 = vsyncpa [#allocation3], 0
    %s8 = scalar_lea.sflag [#allocation3], 1
    %9 = vsyncpa %s8, 0
    loop: start=0, step=1, limit=4
    $region2: #{tpu_custom_call.1} parent=1 // loop_pre_header
      _
    $region3: #{tpu_custom_call.1} parent=1 // loop_header
      %s11 = sphi 0, %s15
      %p12 = scmp.ge.s32.totalorder %s11, 4
      %s18 = sphi 0, %s30
      %s19 = sphi 0, %s26
      %s20 = sphi 0, %s18
      %s21 = sphi 0, %s19
      %s22 = sphi 0, %s20
      %s23 = sphi 0, %s21
      %s33 = sphi 0, %s35
      %s36 = sphi 0, %s33
      %s37 = sphi 0, %s36
      %s53 = sphi 0, %s37
      %s61 = sphi 0, %s63
      %s64 = sphi 0, %s61
      %s65 = sphi 0, %s64
      %s81 = sphi 0, %s65
      %s89 = sphi 0, %s91
      %s92 = sphi 0, %s89
      %s93 = sphi 0, %s92
      %s109 = sphi 0, %s93
    $region4: #{tpu_custom_call.1} parent=1 // loop_header_branch
      %14 = sbr.rel (%p12) target = $region8
    $region5: #{tpu_custom_call.1} parent=1 // loop_body
      %s16 = ssub.s32 %s11, 1
      %s17 = ssub.s32 %s11, 2
      %s24 = sadd.s32 1, %s19
      %p25 = scmp.ge.s32.totalorder %s24, 1
      %s26 = scalar_select %p25, 0, %s24
      %s27 = sadd.s32 1, %s18
      %s28 = scalar_select %p25, %s27, %s18
      %p29 = scmp.ge.s32.totalorder %s28, 2
      %s30 = scalar_select %p29, 0, %s28
      %s31 = ssub.s32 %s18, %s30
      %p32 = scmp.eq.s32.totalorder %s31, 0
      %s34 = sadd.s32 %s33, 1
      %s35 = scalar_select %p32, %s33, %s34
      %p38 = pneg %p32
      %p39 = scmp.eq.s32.totalorder %s11, 1
      %p40 = por %p38, %p39
      %p41 = scmp.ne.s32.totalorder %s33, %s36
      %p42 = scmp.eq.s32.totalorder %s11, 0
      %p43 = por %p41, %p42
      %p44 = scmp.ne.s32.totalorder %s33, %s36
      %p45 = scmp.eq.s32.totalorder %s16, 1
      %p46 = por %p44, %p45
      %p47 = scmp.ne.s32.totalorder %s36, %s37
      %p48 = scmp.eq.s32.totalorder %s16, 0
      %p49 = por %p47, %p48
      %p50 = scmp.ne.s32.totalorder %s36, %s37
      %p51 = scmp.eq.s32.totalorder %s17, 1
      %p52 = por %p50, %p51
      %p54 = scmp.ne.s32.totalorder %s37, %s53
      %p55 = scmp.eq.s32.totalorder %s17, 0
      %p56 = por %p54, %p55
      %s57 = ssub.s32 %s18, %s30
      %s58 = ssub.s32 %s19, %s26
      %s59 = sor.u32 %s57, %s58
      %p60 = scmp.eq.s32.totalorder %s59, 0
      %s62 = sadd.s32 %s61, 1
      %s63 = scalar_select %p60, %s61, %s62
      %p66 = pneg %p60
      %p67 = scmp.eq.s32.totalorder %s11, 1
      %p68 = por %p66, %p67
      %p69 = scmp.ne.s32.totalorder %s61, %s64
      %p70 = scmp.eq.s32.totalorder %s11, 0
      %p71 = por %p69, %p70
      %p72 = scmp.ne.s32.totalorder %s61, %s64
      %p73 = scmp.eq.s32.totalorder %s16, 1
      %p74 = por %p72, %p73
      %p75 = scmp.ne.s32.totalorder %s64, %s65
      %p76 = scmp.eq.s32.totalorder %s16, 0
      %p77 = por %p75, %p76
      %p78 = scmp.ne.s32.totalorder %s64, %s65
      %p79 = scmp.eq.s32.totalorder %s17, 1
      %p80 = por %p78, %p79
      %p82 = scmp.ne.s32.totalorder %s65, %s81
      %p83 = scmp.eq.s32.totalorder %s17, 0
      %p84 = por %p82, %p83
      %s85 = ssub.s32 %s18, %s30
      %s86 = ssub.s32 %s19, %s26
      %s87 = sor.u32 %s85, %s86
      %p88 = scmp.eq.s32.totalorder %s87, 0
      %s90 = sadd.s32 %s89, 1
      %s91 = scalar_select %p88, %s89, %s90
      %p94 = pneg %p88
      %p95 = scmp.eq.s32.totalorder %s11, 1
      %p96 = por %p94, %p95
      %p97 = scmp.ne.s32.totalorder %s89, %s92
      %p98 = scmp.eq.s32.totalorder %s11, 0
      %p99 = por %p97, %p98
      %p100 = scmp.ne.s32.totalorder %s89, %s92
      %p101 = scmp.eq.s32.totalorder %s16, 1
      %p102 = por %p100, %p101
      %p103 = scmp.ne.s32.totalorder %s92, %s93
      %p104 = scmp.eq.s32.totalorder %s16, 0
      %p105 = por %p103, %p104
      %p106 = scmp.ne.s32.totalorder %s92, %s93
      %p107 = scmp.eq.s32.totalorder %s17, 1
      %p108 = por %p106, %p107
      %p110 = scmp.ne.s32.totalorder %s93, %s109
      %p111 = scmp.eq.s32.totalorder %s17, 0
      %p112 = por %p110, %p111
      %p113 = scmp.le.s32.totalorder 1, %s11
      %p114 = scmp.lt.s32.totalorder %s11, 3
      %p115 = pnand %p113, %p114
      %p116 = pneg %p115
      // Predicated region
      $region9: #{tpu_custom_call.1} parent=5 // pred_check
        _
      $region10: #{tpu_custom_call.1} parent=5 // pred_check_branch
        %118 = sbr.rel (%p115) target = $region12
      $region11: #{tpu_custom_call.1} parent=5 // pred_region
        %s119 = ssub.s32 %s11, 1
      $region12: #{tpu_custom_call.1} parent=5 // pred_fallthru
        _
      %p120 = scmp.lt.s32.totalorder %s11, 2
      // Predicated region
      $region13: #{tpu_custom_call.1} parent=5 // pred_check
        %p121 = pneg %p120
      $region14: #{tpu_custom_call.1} parent=5 // pred_check_branch
        %123 = sbr.rel (%p121) target = $region16
      $region15: #{tpu_custom_call.1} parent=5 // pred_region
        // Predicated region
        $region17: #{tpu_custom_call.1} parent=15 // pred_check
          %p124 = pneg %p43
        $region18: #{tpu_custom_call.1} parent=15 // pred_check_branch
          %126 = sbr.rel (%p124) target = $region20
        $region19: #{tpu_custom_call.1} parent=15 // pred_region
          %s127 = smul.u32 16, %s18
          %p128 = scmp.lt.s32.totalorder %s127, 31
          %s129 = scalar_select %p128, %s127, 31
          %s130 = smul.addr %s129, 8
          %s131 = scalar_lea.vmem %s0, %s130
          %s132 = smul.u32 16, %s18
        $region20: #{tpu_custom_call.1} parent=15 // pred_fallthru
          _
        // Predicated region
        $region21: #{tpu_custom_call.1} parent=15 // pred_check
          %p133 = pneg %p71
        $region22: #{tpu_custom_call.1} parent=15 // pred_check_branch
          %135 = sbr.rel (%p133) target = $region24
        $region23: #{tpu_custom_call.1} parent=15 // pred_region
          %s136 = smul.u32 4, %s18
          %s137 = smul.u32 4, %s19
          %p138 = scmp.lt.s32.totalorder %s136, 7
          %s139 = scalar_select %p138, %s136, 7
          %p140 = scmp.lt.s32.totalorder %s137, 3
          %s141 = scalar_select %p140, %s137, 3
          %s142 = smul.addr %s139, 4
          %s143 = sadd.s32 %s141, %s142
          %s144 = smul.addr %s143, 8
          %s145 = scalar_lea.vmem %s1, %s144
          %s146 = smul.u32 4, %s18
          %s147 = smul.u32 4, %s19
        $region24: #{tpu_custom_call.1} parent=15 // pred_fallthru
          _
      $region16: #{tpu_custom_call.1} parent=5 // pred_fallthru
        _
      %p148 = scmp.le.s32.totalorder 1, %s11
      %p149 = scmp.lt.s32.totalorder %s11, 3
      %p150 = pnand %p148, %p149
      %p151 = pneg %p150
      // Predicated region
      $region25: #{tpu_custom_call.1} parent=5 // pred_check
        _
      $region26: #{tpu_custom_call.1} parent=5 // pred_check_branch
        %153 = sbr.rel (%p150) target = $region28
      $region27: #{tpu_custom_call.1} parent=5 // pred_region
        %s154 = ssub.s32 %s11, 1
        %s155 = smul.u32 16, %s20
        %p156 = scmp.lt.s32.totalorder %s155, 31
        %s157 = scalar_select %p156, %s155, 31
        %s158 = smul.addr %s157, 8
        %s159 = scalar_lea.vmem %s0, %s158
        %p160 = pneg %p49
        %p161 = pneg %p46
        %s162 = smul.u32 4, %s20
        %s163 = smul.u32 4, %s21
        %p164 = scmp.lt.s32.totalorder %s162, 7
        %s165 = scalar_select %p164, %s162, 7
        %p166 = scmp.lt.s32.totalorder %s163, 3
        %s167 = scalar_select %p166, %s163, 3
        %s168 = smul.addr %s165, 4
        %s169 = sadd.s32 %s167, %s168
        %s170 = smul.addr %s169, 8
        %s171 = scalar_lea.vmem %s1, %s170
        %p172 = pneg %p77
        %p173 = pneg %p74
        %p174 = pneg %p105
        %p175 = pneg %p102
        %s176 = sand.u32 %s92, 1
        %s177 = scalar_lea.sflag [#allocation3], %s176
        %s178 = sand.u32 %s92, 1
        %s179 = smul.addr %s178, 512
        %s180 = scalar_lea.vmem [#allocation2], %s179
        %s181 = smul.u32 16, %s20
        %p182 = scmp.lt.s32.totalorder %s181, 31
        %s183 = scalar_select %p182, %s181, 31
        %s184 = smul.addr %s183, 8
        %s185 = scalar_lea.vmem %s0, %s184
        %s186 = smul.u32 16, %s20
        %s187 = smul.u32 4, %s20
        %s188 = smul.u32 4, %s21
        %p189 = scmp.lt.s32.totalorder %s187, 7
        %s190 = scalar_select %p189, %s187, 7
        %p191 = scmp.lt.s32.totalorder %s188, 3
        %s192 = scalar_select %p191, %s188, 3
        %s193 = smul.addr %s190, 4
        %s194 = sadd.s32 %s192, %s193
        %s195 = smul.addr %s194, 8
        %s196 = scalar_lea.vmem %s1, %s195
        %s197 = smul.u32 4, %s20
        %s198 = smul.u32 4, %s21
        %s199 = smul.u32 16, %s20
        %s200 = smul.u32 4, %s21
        %v201 = vld [vmem:[%s185] sm:$0xff]
        %v202 = vld [vmem:[%s185 + $0x8] sm:$0xff]
        %v203 = vld [vmem:[%s185 + $0x10] sm:$0xff]
        %v204 = vld [vmem:[%s185 + $0x18] sm:$0xff]
        %v205 = vld [vmem:[%s185 + $0x20] sm:$0xff]
        %v206 = vld [vmem:[%s185 + $0x28] sm:$0xff]
        %v207 = vld [vmem:[%s185 + $0x30] sm:$0xff]
        %v208 = vld [vmem:[%s185 + $0x38] sm:$0xff]
        %v209 = vld [vmem:[%s185 + $0x40] sm:$0xff]
        %v210 = vld [vmem:[%s185 + $0x48] sm:$0xff]
        %v211 = vld [vmem:[%s185 + $0x50] sm:$0xff]
        %v212 = vld [vmem:[%s185 + $0x58] sm:$0xff]
        %v213 = vld [vmem:[%s185 + $0x60] sm:$0xff]
        %v214 = vld [vmem:[%s185 + $0x68] sm:$0xff]
        %v215 = vld [vmem:[%s185 + $0x70] sm:$0xff]
        %v216 = vld [vmem:[%s185 + $0x78] sm:$0xff]
        %v217 = vld [vmem:[%s196] sm:$0xff]
        %v218 = vld [vmem:[%s196 + $0x8] sm:$0xff]
        %v219 = vld [vmem:[%s196 + $0x10] sm:$0xff]
        %v220 = vld [vmem:[%s196 + $0x18] sm:$0xff]
        %v221 = vld [vmem:[%s196 + $0x20] sm:$0xff]
        %v222 = vld [vmem:[%s196 + $0x28] sm:$0xff]
        %v223 = vld [vmem:[%s196 + $0x30] sm:$0xff]
        %v224 = vld [vmem:[%s196 + $0x38] sm:$0xff]
        %v225 = vld [vmem:[%s196 + $0x40] sm:$0xff]
        %v226 = vld [vmem:[%s196 + $0x48] sm:$0xff]
        %v227 = vld [vmem:[%s196 + $0x50] sm:$0xff]
        %v228 = vld [vmem:[%s196 + $0x58] sm:$0xff]
        %v229 = vld [vmem:[%s196 + $0x60] sm:$0xff]
        %v230 = vld [vmem:[%s196 + $0x68] sm:$0xff]
        %v231 = vld [vmem:[%s196 + $0x70] sm:$0xff]
        %v232 = vld [vmem:[%s196 + $0x78] sm:$0xff]
        %v233 = vunpack.c.0.s8 %v217
        %v234 = vunpack.c.0.s8 %v218
        %v235 = vunpack.c.0.s8 %v219
        %v236 = vunpack.c.0.s8 %v220
        %v237 = vunpack.c.1.s8 %v217
        %v238 = vunpack.c.1.s8 %v218
        %v239 = vunpack.c.1.s8 %v219
        %v240 = vunpack.c.1.s8 %v220
        %v241 = vunpack.c.2.s8 %v217
        %v242 = vunpack.c.2.s8 %v218
        %v243 = vunpack.c.2.s8 %v219
        %v244 = vunpack.c.2.s8 %v220
        %v245 = vunpack.c.3.s8 %v217
        %v246 = vunpack.c.3.s8 %v218
        %v247 = vunpack.c.3.s8 %v219
        %v248 = vunpack.c.3.s8 %v220
        %v249 = vunpack.c.0.s8 %v221
        %v250 = vunpack.c.0.s8 %v222
        %v251 = vunpack.c.0.s8 %v223
        %v252 = vunpack.c.0.s8 %v224
        %v253 = vunpack.c.1.s8 %v221
        %v254 = vunpack.c.1.s8 %v222
        %v255 = vunpack.c.1.s8 %v223
        %v256 = vunpack.c.1.s8 %v224
        %v257 = vunpack.c.2.s8 %v221
        %v258 = vunpack.c.2.s8 %v222
        %v259 = vunpack.c.2.s8 %v223
        %v260 = vunpack.c.2.s8 %v224
        %v261 = vunpack.c.3.s8 %v221
        %v262 = vunpack.c.3.s8 %v222
        %v263 = vunpack.c.3.s8 %v223
        %v264 = vunpack.c.3.s8 %v224
        %v265 = vunpack.c.0.s8 %v225
        %v266 = vunpack.c.0.s8 %v226
        %v267 = vunpack.c.0.s8 %v227
        %v268 = vunpack.c.0.s8 %v228
        %v269 = vunpack.c.1.s8 %v225
        %v270 = vunpack.c.1.s8 %v226
        %v271 = vunpack.c.1.s8 %v227
        %v272 = vunpack.c.1.s8 %v228
        %v273 = vunpack.c.2.s8 %v225
        %v274 = vunpack.c.2.s8 %v226
        %v275 = vunpack.c.2.s8 %v227
        %v276 = vunpack.c.2.s8 %v228
        %v277 = vunpack.c.3.s8 %v225
        %v278 = vunpack.c.3.s8 %v226
        %v279 = vunpack.c.3.s8 %v227
        %v280 = vunpack.c.3.s8 %v228
        %v281 = vunpack.c.0.s8 %v229
        %v282 = vunpack.c.0.s8 %v230
        %v283 = vunpack.c.0.s8 %v231
        %v284 = vunpack.c.0.s8 %v232
        %v285 = vunpack.c.1.s8 %v229
        %v286 = vunpack.c.1.s8 %v230
        %v287 = vunpack.c.1.s8 %v231
        %v288 = vunpack.c.1.s8 %v232
        %v289 = vunpack.c.2.s8 %v229
        %v290 = vunpack.c.2.s8 %v230
        %v291 = vunpack.c.2.s8 %v231
        %v292 = vunpack.c.2.s8 %v232
        %v293 = vunpack.c.3.s8 %v229
        %v294 = vunpack.c.3.s8 %v230
        %v295 = vunpack.c.3.s8 %v231
        %v296 = vunpack.c.3.s8 %v232
        %v297 = vcvt.s32.f32 %v233
        %v298 = vcvt.s32.f32 %v234
        %v299 = vcvt.s32.f32 %v235
        %v300 = vcvt.s32.f32 %v236
        %v301 = vcvt.s32.f32 %v237
        %v302 = vcvt.s32.f32 %v238
        %v303 = vcvt.s32.f32 %v239
        %v304 = vcvt.s32.f32 %v240
        %v305 = vcvt.s32.f32 %v241
        %v306 = vcvt.s32.f32 %v242
        %v307 = vcvt.s32.f32 %v243
        %v308 = vcvt.s32.f32 %v244
        %v309 = vcvt.s32.f32 %v245
        %v310 = vcvt.s32.f32 %v246
        %v311 = vcvt.s32.f32 %v247
        %v312 = vcvt.s32.f32 %v248
        %v313 = vcvt.s32.f32 %v249
        %v314 = vcvt.s32.f32 %v250
        %v315 = vcvt.s32.f32 %v251
        %v316 = vcvt.s32.f32 %v252
        %v317 = vcvt.s32.f32 %v253
        %v318 = vcvt.s32.f32 %v254
        %v319 = vcvt.s32.f32 %v255
        %v320 = vcvt.s32.f32 %v256
        %v321 = vcvt.s32.f32 %v257
        %v322 = vcvt.s32.f32 %v258
        %v323 = vcvt.s32.f32 %v259
        %v324 = vcvt.s32.f32 %v260
        %v325 = vcvt.s32.f32 %v261
        %v326 = vcvt.s32.f32 %v262
        %v327 = vcvt.s32.f32 %v263
        %v328 = vcvt.s32.f32 %v264
        %v329 = vcvt.s32.f32 %v265
        %v330 = vcvt.s32.f32 %v266
        %v331 = vcvt.s32.f32 %v267
        %v332 = vcvt.s32.f32 %v268
        %v333 = vcvt.s32.f32 %v269
        %v334 = vcvt.s32.f32 %v270
        %v335 = vcvt.s32.f32 %v271
        %v336 = vcvt.s32.f32 %v272
        %v337 = vcvt.s32.f32 %v273
        %v338 = vcvt.s32.f32 %v274
        %v339 = vcvt.s32.f32 %v275
        %v340 = vcvt.s32.f32 %v276
        %v341 = vcvt.s32.f32 %v277
        %v342 = vcvt.s32.f32 %v278
        %v343 = vcvt.s32.f32 %v279
        %v344 = vcvt.s32.f32 %v280
        %v345 = vcvt.s32.f32 %v281
        %v346 = vcvt.s32.f32 %v282
        %v347 = vcvt.s32.f32 %v283
        %v348 = vcvt.s32.f32 %v284
        %v349 = vcvt.s32.f32 %v285
        %v350 = vcvt.s32.f32 %v286
        %v351 = vcvt.s32.f32 %v287
        %v352 = vcvt.s32.f32 %v288
        %v353 = vcvt.s32.f32 %v289
        %v354 = vcvt.s32.f32 %v290
        %v355 = vcvt.s32.f32 %v291
        %v356 = vcvt.s32.f32 %v292
        %v357 = vcvt.s32.f32 %v293
        %v358 = vcvt.s32.f32 %v294
        %v359 = vcvt.s32.f32 %v295
        %v360 = vcvt.s32.f32 %v296
        %362 = vset.pattern.permute.xlu0 0
        %363 = vperm.xlu0 %362, %v201
        %v364 = vpop.permute.xlu0 %363
        %367 = vset.pattern.permute.xlu0 0
        %368 = vperm.xlu0 %367, %v202
        %v369 = vpop.permute.xlu0 %368
        %372 = vset.pattern.permute.xlu0 0
        %373 = vperm.xlu0 %372, %v203
        %v374 = vpop.permute.xlu0 %373
        %377 = vset.pattern.permute.xlu0 0
        %378 = vperm.xlu0 %377, %v204
        %v379 = vpop.permute.xlu0 %378
        %382 = vset.pattern.permute.xlu0 0
        %383 = vperm.xlu0 %382, %v205
        %v384 = vpop.permute.xlu0 %383
        %387 = vset.pattern.permute.xlu0 0
        %388 = vperm.xlu0 %387, %v206
        %v389 = vpop.permute.xlu0 %388
        %392 = vset.pattern.permute.xlu0 0
        %393 = vperm.xlu0 %392, %v207
        %v394 = vpop.permute.xlu0 %393
        %397 = vset.pattern.permute.xlu0 0
        %398 = vperm.xlu0 %397, %v208
        %v399 = vpop.permute.xlu0 %398
        %402 = vset.pattern.permute.xlu0 0
        %403 = vperm.xlu0 %402, %v209
        %v404 = vpop.permute.xlu0 %403
        %407 = vset.pattern.permute.xlu0 0
        %408 = vperm.xlu0 %407, %v210
        %v409 = vpop.permute.xlu0 %408
        %412 = vset.pattern.permute.xlu0 0
        %413 = vperm.xlu0 %412, %v211
        %v414 = vpop.permute.xlu0 %413
        %417 = vset.pattern.permute.xlu0 0
        %418 = vperm.xlu0 %417, %v212
        %v419 = vpop.permute.xlu0 %418
        %422 = vset.pattern.permute.xlu0 0
        %423 = vperm.xlu0 %422, %v213
        %v424 = vpop.permute.xlu0 %423
        %427 = vset.pattern.permute.xlu0 0
        %428 = vperm.xlu0 %427, %v214
        %v429 = vpop.permute.xlu0 %428
        %432 = vset.pattern.permute.xlu0 0
        %433 = vperm.xlu0 %432, %v215
        %v434 = vpop.permute.xlu0 %433
        %437 = vset.pattern.permute.xlu0 0
        %438 = vperm.xlu0 %437, %v216
        %v439 = vpop.permute.xlu0 %438
        %v441 = vmul.f32 %v297, %v364
        %v442 = vmul.f32 %v298, %v364
        %v443 = vmul.f32 %v299, %v364
        %v444 = vmul.f32 %v300, %v364
        %v445 = vmul.f32 %v301, %v369
        %v446 = vmul.f32 %v302, %v369
        %v447 = vmul.f32 %v303, %v369
        %v448 = vmul.f32 %v304, %v369
        %v449 = vmul.f32 %v305, %v374
        %v450 = vmul.f32 %v306, %v374
        %v451 = vmul.f32 %v307, %v374
        %v452 = vmul.f32 %v308, %v374
        %v453 = vmul.f32 %v309, %v379
        %v454 = vmul.f32 %v310, %v379
        %v455 = vmul.f32 %v311, %v379
        %v456 = vmul.f32 %v312, %v379
        %v457 = vmul.f32 %v313, %v384
        %v458 = vmul.f32 %v314, %v384
        %v459 = vmul.f32 %v315, %v384
        %v460 = vmul.f32 %v316, %v384
        %v461 = vmul.f32 %v317, %v389
        %v462 = vmul.f32 %v318, %v389
        %v463 = vmul.f32 %v319, %v389
        %v464 = vmul.f32 %v320, %v389
        %v465 = vmul.f32 %v321, %v394
        %v466 = vmul.f32 %v322, %v394
        %v467 = vmul.f32 %v323, %v394
        %v468 = vmul.f32 %v324, %v394
        %v469 = vmul.f32 %v325, %v399
        %v470 = vmul.f32 %v326, %v399
        %v471 = vmul.f32 %v327, %v399
        %v472 = vmul.f32 %v328, %v399
        %v473 = vmul.f32 %v329, %v404
        %v474 = vmul.f32 %v330, %v404
        %v475 = vmul.f32 %v331, %v404
        %v476 = vmul.f32 %v332, %v404
        %v477 = vmul.f32 %v333, %v409
        %v478 = vmul.f32 %v334, %v409
        %v479 = vmul.f32 %v335, %v409
        %v480 = vmul.f32 %v336, %v409
        %v481 = vmul.f32 %v337, %v414
        %v482 = vmul.f32 %v338, %v414
        %v483 = vmul.f32 %v339, %v414
        %v484 = vmul.f32 %v340, %v414
        %v485 = vmul.f32 %v341, %v419
        %v486 = vmul.f32 %v342, %v419
        %v487 = vmul.f32 %v343, %v419
        %v488 = vmul.f32 %v344, %v419
        %v489 = vmul.f32 %v345, %v424
        %v490 = vmul.f32 %v346, %v424
        %v491 = vmul.f32 %v347, %v424
        %v492 = vmul.f32 %v348, %v424
        %v493 = vmul.f32 %v349, %v429
        %v494 = vmul.f32 %v350, %v429
        %v495 = vmul.f32 %v351, %v429
        %v496 = vmul.f32 %v352, %v429
        %v497 = vmul.f32 %v353, %v434
        %v498 = vmul.f32 %v354, %v434
        %v499 = vmul.f32 %v355, %v434
        %v500 = vmul.f32 %v356, %v434
        %v501 = vmul.f32 %v357, %v439
        %v502 = vmul.f32 %v358, %v439
        %v503 = vmul.f32 %v359, %v439
        %v504 = vmul.f32 %v360, %v439
        %505 = vst [vmem:[%s180] sm:$0xff] %v441
        %506 = vst [vmem:[%s180 + $0x8] sm:$0xff] %v442
        %507 = vst [vmem:[%s180 + $0x10] sm:$0xff] %v443
        %508 = vst [vmem:[%s180 + $0x18] sm:$0xff] %v444
        %509 = vst [vmem:[%s180 + $0x20] sm:$0xff] %v445
        %510 = vst [vmem:[%s180 + $0x28] sm:$0xff] %v446
        %511 = vst [vmem:[%s180 + $0x30] sm:$0xff] %v447
        %512 = vst [vmem:[%s180 + $0x38] sm:$0xff] %v448
        %513 = vst [vmem:[%s180 + $0x40] sm:$0xff] %v449
        %514 = vst [vmem:[%s180 + $0x48] sm:$0xff] %v450
        %515 = vst [vmem:[%s180 + $0x50] sm:$0xff] %v451
        %516 = vst [vmem:[%s180 + $0x58] sm:$0xff] %v452
        %517 = vst [vmem:[%s180 + $0x60] sm:$0xff] %v453
        %518 = vst [vmem:[%s180 + $0x68] sm:$0xff] %v454
        %519 = vst [vmem:[%s180 + $0x70] sm:$0xff] %v455
        %520 = vst [vmem:[%s180 + $0x78] sm:$0xff] %v456
        %521 = vst [vmem:[%s180 + $0x80] sm:$0xff] %v457
        %522 = vst [vmem:[%s180 + $0x88] sm:$0xff] %v458
        %523 = vst [vmem:[%s180 + $0x90] sm:$0xff] %v459
        %524 = vst [vmem:[%s180 + $0x98] sm:$0xff] %v460
        %525 = vst [vmem:[%s180 + $0xa0] sm:$0xff] %v461
        %526 = vst [vmem:[%s180 + $0xa8] sm:$0xff] %v462
        %527 = vst [vmem:[%s180 + $0xb0] sm:$0xff] %v463
        %528 = vst [vmem:[%s180 + $0xb8] sm:$0xff] %v464
        %529 = vst [vmem:[%s180 + $0xc0] sm:$0xff] %v465
        %530 = vst [vmem:[%s180 + $0xc8] sm:$0xff] %v466
        %531 = vst [vmem:[%s180 + $0xd0] sm:$0xff] %v467
        %532 = vst [vmem:[%s180 + $0xd8] sm:$0xff] %v468
        %533 = vst [vmem:[%s180 + $0xe0] sm:$0xff] %v469
        %534 = vst [vmem:[%s180 + $0xe8] sm:$0xff] %v470
        %535 = vst [vmem:[%s180 + $0xf0] sm:$0xff] %v471
        %536 = vst [vmem:[%s180 + $0xf8] sm:$0xff] %v472
        %537 = vst [vmem:[%s180 + $0x100] sm:$0xff] %v473
        %538 = vst [vmem:[%s180 + $0x108] sm:$0xff] %v474
        %539 = vst [vmem:[%s180 + $0x110] sm:$0xff] %v475
        %540 = vst [vmem:[%s180 + $0x118] sm:$0xff] %v476
        %541 = vst [vmem:[%s180 + $0x120] sm:$0xff] %v477
        %542 = vst [vmem:[%s180 + $0x128] sm:$0xff] %v478
        %543 = vst [vmem:[%s180 + $0x130] sm:$0xff] %v479
        %544 = vst [vmem:[%s180 + $0x138] sm:$0xff] %v480
        %545 = vst [vmem:[%s180 + $0x140] sm:$0xff] %v481
        %546 = vst [vmem:[%s180 + $0x148] sm:$0xff] %v482
        %547 = vst [vmem:[%s180 + $0x150] sm:$0xff] %v483
        %548 = vst [vmem:[%s180 + $0x158] sm:$0xff] %v484
        %549 = vst [vmem:[%s180 + $0x160] sm:$0xff] %v485
        %550 = vst [vmem:[%s180 + $0x168] sm:$0xff] %v486
        %551 = vst [vmem:[%s180 + $0x170] sm:$0xff] %v487
        %552 = vst [vmem:[%s180 + $0x178] sm:$0xff] %v488
        %553 = vst [vmem:[%s180 + $0x180] sm:$0xff] %v489
        %554 = vst [vmem:[%s180 + $0x188] sm:$0xff] %v490
        %555 = vst [vmem:[%s180 + $0x190] sm:$0xff] %v491
        %556 = vst [vmem:[%s180 + $0x198] sm:$0xff] %v492
        %557 = vst [vmem:[%s180 + $0x1a0] sm:$0xff] %v493
        %558 = vst [vmem:[%s180 + $0x1a8] sm:$0xff] %v494
        %559 = vst [vmem:[%s180 + $0x1b0] sm:$0xff] %v495
        %560 = vst [vmem:[%s180 + $0x1b8] sm:$0xff] %v496
        %561 = vst [vmem:[%s180 + $0x1c0] sm:$0xff] %v497
        %562 = vst [vmem:[%s180 + $0x1c8] sm:$0xff] %v498
        %563 = vst [vmem:[%s180 + $0x1d0] sm:$0xff] %v499
        %564 = vst [vmem:[%s180 + $0x1d8] sm:$0xff] %v500
        %565 = vst [vmem:[%s180 + $0x1e0] sm:$0xff] %v501
        %566 = vst [vmem:[%s180 + $0x1e8] sm:$0xff] %v502
        %567 = vst [vmem:[%s180 + $0x1f0] sm:$0xff] %v503
        %568 = vst [vmem:[%s180 + $0x1f8] sm:$0xff] %v504
        %s569 = sand.u32 %s92, 1
        %s570 = scalar_lea.sflag [#allocation3], %s569
        %s571 = sand.u32 %s92, 1
        %s572 = smul.addr %s571, 512
        %s573 = scalar_lea.vmem [#allocation2], %s572
        // Predicated region
        $region29: #{tpu_custom_call.1} parent=27 // pred_check
          %p574 = pneg %p102
        $region30: #{tpu_custom_call.1} parent=27 // pred_check_branch
          %576 = sbr.rel (%p574) target = $region32
        $region31: #{tpu_custom_call.1} parent=27 // pred_region
          %s577 = smul.u32 16, %s20
          %s578 = smul.u32 4, %s21
          %580 = vsyncadd %s570, 0
          %s581 = smul.addr %s577, 4
          %s582 = sadd.s32 %s578, %s581
          %s583 = smul.addr %s582, 8
          %s584 = scalar_lea.hbm %s2, %s583
          %s585 = sshll.u32 %s573, 4
          %s586 = int_to_ptr.vmem [resolvable:$true] %s585
          %s587 = sshll.u32 %s584, 4
          %s588 = int_to_ptr.hbm [resolvable:$true] %s587
          %593 = dma.vmem_to_hbm [thread:$0]  %s586, 8192, %s588, %s570, 512, 512, 32
        $region32: #{tpu_custom_call.1} parent=27 // pred_fallthru
          _
      $region28: #{tpu_custom_call.1} parent=5 // pred_fallthru
        _
      %p594 = scmp.le.s32.totalorder 2, %s11
      // Predicated region
      $region33: #{tpu_custom_call.1} parent=5 // pred_check
        %p595 = pneg %p594
      $region34: #{tpu_custom_call.1} parent=5 // pred_check_branch
        %597 = sbr.rel (%p595) target = $region36
      $region35: #{tpu_custom_call.1} parent=5 // pred_region
        %s598 = ssub.s32 %s11, 2
        // Predicated region
        $region37: #{tpu_custom_call.1} parent=35 // pred_check
          %p599 = pneg %p108
        $region38: #{tpu_custom_call.1} parent=35 // pred_check_branch
          %601 = sbr.rel (%p599) target = $region40
        $region39: #{tpu_custom_call.1} parent=35 // pred_region
          %s602 = sand.u32 %s93, 1
          %s603 = scalar_lea.sflag [#allocation3], %s602
          %s604 = sand.u32 %s93, 1
          %s605 = smul.addr %s604, 512
          %s606 = scalar_lea.vmem [#allocation2], %s605
          %608 = dma.done %s603, 8192
        $region40: #{tpu_custom_call.1} parent=35 // pred_fallthru
          _
      $region36: #{tpu_custom_call.1} parent=5 // pred_fallthru
        _
    $region6: #{tpu_custom_call.1} parent=1 // loop_footer
      %s15 = sadd.s32 1, %s11
    $region7: #{tpu_custom_call.1} parent=1 // loop_footer_branch
      %10 = sbr.rel target = $region3
    $region8: #{tpu_custom_call.1} parent=1 // loop_exit
      _
    %609 = vsyncpa [#allocation3], 1
    %s610 = scalar_lea.sflag [#allocation3], 1
    %611 = vsyncpa %s610, 1

</llo_original>
